<compile_context>
chip_gen: v5e
topology: v5e:2x2
jax: 0.10.0
libtpu: 0.0.40
codegen_flags: <defaults>
</compile_context>

<pallas_src>
import jax
import jax.numpy as jnp
from jax.experimental import pallas as pl
from jax.experimental.pallas import tpu as pltpu


def _upblock_kernel(x_ref, t_ref, w1_ref, w2_ref, wt_ref, msp_ref, bias_ref,
                    shift_ref, out_ref):
    """Row-block body; all activations are lane-dense (RB, V*C) slabs."""
    VC2 = out_ref.shape[-1]
    f32 = jnp.float32

    b1 = bias_ref[0:1, :]      # conv1 bias + folded 1x1-skip bias (tiled over V)
    b2 = bias_ref[1:2, :]      # conv2 bias
    bt = bias_ref[2:3, :]      # time-embedding conv bias
    bsp = bias_ref[3:4, :]     # spatial-block bias
    brs = bias_ref[4:5, :]     # residual 1x1 shortcut bias
    lnw = bias_ref[5:6, :]     # LayerNorm weight (V, C2) flattened
    lnb = bias_ref[6:7, :]     # LayerNorm bias

    # Block-diagonal causal shifts: (S_s @ y)[row] = y[row - s] within the same
    # T-segment (batch element), 0 otherwise. Precomputed in the wrapper.
    s1 = shift_ref[0]                                           # (RB, RB) f32
    s2 = shift_ref[1]

    xb = x_ref[...].astype(jnp.bfloat16)                        # (RB, V*C1)

    # ---- TCN block 1 (V-band weights, folded 1x1 skip) + residual 1x1 shortcut:
    #      one (RB, V*C1) x (V*C1, 4*V*C2) bf16 matmul, f32 accumulation. ------
    y = jnp.dot(xb, w1_ref[...], preferred_element_type=f32)    # (RB, 4*V*C2)
    y0 = y[:, 0 * VC2:1 * VC2]      # contribution of T-tap t-2
    y1 = y[:, 1 * VC2:2 * VC2]      # contribution of T-tap t-1
    y2 = y[:, 2 * VC2:3 * VC2]      # contribution of T-tap t (holds folded skip)
    ysc = y[:, 3 * VC2:4 * VC2]     # residual 1x1 shortcut of the block input

    # diffusion-time embedding 1x1 conv (weight pre-tiled over V -> lane-dense)
    te = jnp.dot(t_ref[...].astype(jnp.bfloat16), wt_ref[...],
                 preferred_element_type=f32) + bt               # (RB, V*C2)

    h = (jnp.dot(s2, y0, preferred_element_type=f32)
         + jnp.dot(s1, y1, preferred_element_type=f32)
         + y2 + b1 + te)                                        # (RB, V*C2) f32

    # ---- TCN block 2 (identity skip): one (RB, V*C2) x (V*C2, 3*V*C2) matmul --
    z = jnp.dot(h.astype(jnp.bfloat16), w2_ref[...],
                preferred_element_type=f32)                     # (RB, 3*V*C2)
    z0 = z[:, 0 * VC2:1 * VC2]
    z1 = z[:, 1 * VC2:2 * VC2]
    z2 = z[:, 2 * VC2:3 * VC2]
    h2 = (jnp.dot(s2, z0, preferred_element_type=f32)
          + jnp.dot(s1, z1, preferred_element_type=f32)
          + z2 + b2 + h)

    # ---- LayerNorm over (V, C2) == one full-width lane reduce per row (f32) ---
    mu = jnp.mean(h2, axis=1, keepdims=True)
    d = h2 - mu
    var = jnp.mean(d * d, axis=1, keepdims=True)
    hn = d * jax.lax.rsqrt(var + 1e-5) * lnw + lnb

    # ---- SpatialBlock: K-support graph conv folded into one (V*C2, V*C2) matmul
    g = jnp.dot(hn.astype(jnp.bfloat16), msp_ref[...],
                preferred_element_type=f32)
    hsp = jnp.maximum(g + bsp + hn, 0.0)

    out_ref[...] = hsp + ysc + brs


def _conv_band_weights(w, V):
    """w: (C_out, C_in, 3, 3), PyTorch OIHW with H = V-kernel, W = T-kernel.

    Returns (3, V*C_in, V*C_out) band matrices B_kt with
        B_kt[v_in*C_in + i, v_out*C_out + o] = w[o, i, v_in - v_out + 1, kt]
    (zero outside the +/-1 V-band), so that for a lane-dense slab
    X[t, v*C_in + i] the causal 3x3 conv is  out[t] = sum_kt X[t + kt - 2] @ B_kt.
    """
    C_out, C_in = w.shape[0], w.shape[1]
    w_kkio = jnp.transpose(w, (3, 2, 1, 0))             # (kt, kv, C_in, C_out)
    vin = jnp.arange(V)[:, None]
    vout = jnp.arange(V)[None, :]
    kv = vin - vout + 1
    valid = ((kv >= 0) & (kv <= 2)).astype(w_kkio.dtype)
    band = w_kkio[:, jnp.clip(kv, 0, 2)]                # (kt, v_in, v_out, i, o)
    band = band * valid[None, :, :, None, None]
    band = jnp.transpose(band, (0, 1, 3, 2, 4))         # (kt, v_in, i, v_out, o)
    return band.reshape(3, V * C_in, V * C_out)


def _pick_row_block(B, T, max_rows=256):
    """Largest divisor of B whose row block (TB*T) stays <= max_rows."""
    tb = 1
    for cand in range(1, B + 1):
        if B % cand == 0 and cand * T <= max_rows:
            tb = cand
    return tb * T


def upblock_forward(x_nchw, t_emb, supports, p):
    """x_nchw: (B, c_in + c_out, V, T); t_emb: (B, d_h); supports: (K, V, V)."""
    B, C1, V, T = x_nchw.shape
    C2 = p['b1'].shape[0]
    d_h = t_emb.shape[1]
    VC1, VC2 = V * C1, V * C2
    bf16 = jnp.bfloat16

    # ---- lane-dense, batch-folded input slabs (layout plumbing only) ----
    x_rows = jnp.transpose(x_nchw, (0, 3, 2, 1)).reshape(B * T, VC1)   # (B*T, V*C1)
    t_rows = jnp.broadcast_to(t_emb[:, None, :], (B, T, d_h)).reshape(B * T, d_h)

    # ---- weight preparation (parameter folding / re-layout, done once) ----
    # Fold TcnBlock1's 1x1 skip into the (kv=1, kt=2) centre tap.
    w1_folded = p['w1'].at[:, :, 1, 2].add(p['w1s'])
    band1 = _conv_band_weights(w1_folded, V)                           # (3, V*C1, V*C2)
    band2 = _conv_band_weights(p['w2'], V)                             # (3, V*C2, V*C2)
    # Residual 1x1 shortcut as block-diagonal (V*C1, V*C2) columns.
    w_sc = jnp.einsum('vw,io->viwo', jnp.eye(V, dtype=jnp.float32),
                      p['wrs'].T).reshape(VC1, VC2)
    # One wide weight: {conv1 tap kt=0,1,2} ++ shortcut  -> N = 4*V*C2.
    w1_all = jnp.concatenate([band1[0], band1[1], band1[2], w_sc], axis=1).astype(bf16)
    w2_all = jnp.concatenate([band2[0], band2[1], band2[2]], axis=1).astype(bf16)
    # Time-embedding 1x1 conv, replicated over V so its output is lane-dense.
    wt_big = jnp.tile(p['wt'].T, (1, V)).astype(bf16)                  # (d_h, V*C2)
    # SpatialBlock graph conv: sum_k kron(A_k^T, theta_k).  A ("supports") and
    # theta are both fixed w.r.t. the data, so this is weight prep.
    m_sp = jnp.einsum('knm,iok->mino', supports,
                      p['theta']).reshape(VC2, VC2).astype(bf16)

    tile_v = lambda b: jnp.tile(b, V)                                  # bias[o] -> bias[v*C2+o]
    biases = jnp.stack([
        tile_v(p['b1'] + p['b1s']),        # 0: conv1 + folded-skip bias
        tile_v(p['b2']),                   # 1: conv2 bias
        tile_v(p['bt']),                   # 2: t-embedding bias
        tile_v(p['spat_b']),               # 3: spatial bias
        tile_v(p['brs']),                  # 4: residual shortcut bias
        p['ln_w'].reshape(VC2),            # 5: LayerNorm weight
        p['ln_b'].reshape(VC2),            # 6: LayerNorm bias
        jnp.zeros((VC2,), jnp.float32),    # 7: pad to 8 sublanes
    ]).astype(jnp.float32)                 # (8, V*C2)

    # Block-diagonal causal shift matrices (per T-segment), precomputed once.
    RB = _pick_row_block(B, T)
    r = jnp.arange(RB)[:, None]
    c = jnp.arange(RB)[None, :]
    same_seg = (r // T) == (c // T)
    s1 = ((r - c == 1) & same_seg).astype(jnp.float32)
    s2 = ((r - c == 2) & same_seg).astype(jnp.float32)
    shifts = jnp.stack([s1, s2])                                       # (2, RB, RB)

    out_rows = pl.pallas_call(
        _upblock_kernel,
        out_shape=jax.ShapeDtypeStruct((B * T, VC2), jnp.float32),
        grid=(B * T // RB,),
        in_specs=[
            pl.BlockSpec((RB, VC1), lambda i: (i, 0)),                # x row block
            pl.BlockSpec((RB, d_h), lambda i: (i, 0)),                # t embedding rows
            pl.BlockSpec(memory_space=pltpu.MemorySpace.VMEM),        # w1_all (bf16)
            pl.BlockSpec(memory_space=pltpu.MemorySpace.VMEM),        # w2_all (bf16)
            pl.BlockSpec(memory_space=pltpu.MemorySpace.VMEM),        # wt_big (bf16)
            pl.BlockSpec(memory_space=pltpu.MemorySpace.VMEM),        # m_sp   (bf16)
            pl.BlockSpec(memory_space=pltpu.MemorySpace.VMEM),        # biases (f32)
            pl.BlockSpec(memory_space=pltpu.MemorySpace.VMEM),        # shifts (f32)
        ],
        out_specs=pl.BlockSpec((RB, VC2), lambda i: (i, 0)),          # lane-dense output
        compiler_params=pltpu.CompilerParams(
            # row blocks are independent -> megacore sharding on v7x
            dimension_semantics=("parallel",),
            # explicit scoped-VMEM budget; re-derive (and additionally tile V)
            # for production DiffSTG sizes, especially on v7x (64 MiB physical).
            vmem_limit_bytes=32 * 1024 * 1024,
        ),
    )(x_rows, t_rows, w1_all, w2_all, wt_big, m_sp, biases, shifts)

    out = out_rows.reshape(B, T, V, C2)
    return jnp.transpose(out, (0, 3, 2, 1))                           # back to (B, C2, V, T)


def init_params(key, c_in, c_out, d_h, V, K):
    """Deterministic synthetic parameters (PyTorch layouts)."""
    C1, C2 = c_in + c_out, c_out
    ks = jax.random.split(key, 14)
    nrm = lambda k, shape, s=0.2: (s * jax.random.normal(k, shape)).astype(jnp.float32)
    return dict(
        w1=nrm(ks[0], (C2, C1, 3, 3)),   b1=nrm(ks[1], (C2,), 0.05),
        w1s=nrm(ks[2], (C2, C1)),        b1s=nrm(ks[3], (C2,), 0.05),
        w2=nrm(ks[4], (C2, C2, 3, 3)),   b2=nrm(ks[5], (C2,), 0.05),
        wt=nrm(ks[6], (C2, d_h)),        bt=nrm(ks[7], (C2,), 0.05),
        ln_w=(1.0 + nrm(ks[8], (V, C2), 0.1)).astype(jnp.float32),
        ln_b=nrm(ks[9], (V, C2), 0.05),
        theta=nrm(ks[10], (C2, C2, K)),  spat_b=nrm(ks[11], (C2,), 0.05),
        wrs=nrm(ks[12], (C2, C1)),       brs=nrm(ks[13], (C2,), 0.05),
    )


def reference_upblock(x, t, A, p):
    """Pure-JAX (NCHW) re-implementation of the PyTorch forward for checking."""
    HI = jax.lax.Precision.HIGHEST

    def conv2d(x, w, b, pad):
        y = jax.lax.conv_general_dilated(
            x, w, (1, 1), ((pad[0], pad[0]), (pad[1], pad[1])),
            dimension_numbers=('NCHW', 'OIHW', 'NCHW'), precision=HI)
        return y + b[None, :, None, None]

    def tcn(x, w, b, ws, bs):
        out = conv2d(x, w, b, (1, 2))[:, :, :, :-2]
        skip = x if ws is None else conv2d(x, ws[:, :, None, None], bs, (0, 0))
        return out + skip

    h = tcn(x, p['w1'], p['b1'], p['w1s'], p['b1s'])
    te = jnp.einsum('od,bd->bo', p['wt'], t, precision=HI) + p['bt']
    h = h + te[:, :, None, None]
    h = tcn(h, p['w2'], p['b2'], None, None)

    ht = jnp.transpose(h, (0, 3, 2, 1))                     # (B, T, V, C2)
    mu = ht.mean(axis=(2, 3), keepdims=True)
    var = ((ht - mu) ** 2).mean(axis=(2, 3), keepdims=True)
    ht = (ht - mu) / jnp.sqrt(var + 1e-5) * p['ln_w'][None, None] + p['ln_b'][None, None]
    h = jnp.transpose(ht, (0, 3, 2, 1))                     # (B, C2, V, T)

    h = jnp.transpose(h, (0, 1, 3, 2))                      # (B, C2, T, V)
    x_c = jnp.einsum('knm,bitm->bitkn', A, h, precision=HI)
    x_gc = jnp.einsum('iok,bitkn->botn', p['theta'], x_c,
                      precision=HI) + p['spat_b'][None, :, None, None]
    h = jax.nn.relu(x_gc + h)
    h = jnp.transpose(h, (0, 1, 3, 2))                      # (B, C2, V, T)

    sc = conv2d(x, p['wrs'][:, :, None, None], p['brs'], (0, 0))
    return h + sc


if __name__ == "__main__":
    # UpBlock(c_in, c_out): its ResidualBlock expects x with c_in + c_out channels.
    B, c_in, c_out, V, T, d_h, K = 2, 8, 8, 16, 8, 16, 2
    C1 = c_in + c_out

    key = jax.random.PRNGKey(0)
    kx, ktk, ka, kp = jax.random.split(key, 4)
    x = jax.random.normal(kx, (B, C1, V, T), jnp.float32)           # NCHW = (B, C, V, T)
    t_emb = jax.random.normal(ktk, (B, d_h), jnp.float32)
    supports = (jax.random.normal(ka, (K, V, V), jnp.float32) / V)  # A_hat

    params = init_params(kp, c_in, c_out, d_h, V, K)

    out = upblock_forward(x, t_emb, supports, params)
    out = jax.block_until_ready(out)
    assert out.shape == (B, c_out, V, T)

    ref = reference_upblock(x, t_emb, supports, params)
    if bool(jnp.allclose(out, ref, atol=5e-2, rtol=5e-2)):
        print("KERNEL_OK")
    else:
        raise RuntimeError(
            f"mismatch: max abs err = {float(jnp.max(jnp.abs(out - ref)))}")
</pallas_src>

<mosaic_0001>
module attributes {stable_mosaic.version = 11 : i64} {
  func.func @_upblock_kernel(%arg0: i32, %arg1: memref<16x256xf32, #tpu.memory_space<vmem>>, %arg2: memref<16x16xf32, #tpu.memory_space<vmem>>, %arg3: memref<256x512xbf16, #tpu.memory_space<vmem>>, %arg4: memref<128x384xbf16, #tpu.memory_space<vmem>>, %arg5: memref<16x128xbf16, #tpu.memory_space<vmem>>, %arg6: memref<128x128xbf16, #tpu.memory_space<vmem>>, %arg7: memref<8x128xf32, #tpu.memory_space<vmem>>, %arg8: memref<2x16x16xf32, #tpu.memory_space<vmem>>, %arg9: memref<16x128xf32, #tpu.memory_space<vmem>>) attributes {dimension_semantics = [#tpu.dimension_semantics<parallel>], iteration_bounds = array<i64: 1>, scalar_prefetch = 0 : i64, scratch_operands = 0 : i64, tpu.core_type = #tpu.core_type<tc>, window_params = [{transform_indices = @transform_0, window_bounds = array<i64: 16, 256>}, {transform_indices = @transform_1, window_bounds = array<i64: 16, 16>}, {pipeline_mode = #tpu.pipeline_mode<synchronous>, transform_indices = @transform_2, window_bounds = array<i64: 256, 512>}, {pipeline_mode = #tpu.pipeline_mode<synchronous>, transform_indices = @transform_3, window_bounds = array<i64: 128, 384>}, {pipeline_mode = #tpu.pipeline_mode<synchronous>, transform_indices = @transform_4, window_bounds = array<i64: 16, 128>}, {pipeline_mode = #tpu.pipeline_mode<synchronous>, transform_indices = @transform_5, window_bounds = array<i64: 128, 128>}, {pipeline_mode = #tpu.pipeline_mode<synchronous>, transform_indices = @transform_6, window_bounds = array<i64: 8, 128>}, {pipeline_mode = #tpu.pipeline_mode<synchronous>, transform_indices = @transform_7, window_bounds = array<i64: 2, 16, 16>}, {transform_indices = @transform_8, window_bounds = array<i64: 16, 128>}]} {
    %c0 = arith.constant 0 : index
    %c0_0 = arith.constant 0 : index
    %0 = vector.load %arg7[%c0, %c0_0] : memref<8x128xf32, #tpu.memory_space<vmem>>, vector<1x128xf32>
    %c1 = arith.constant 1 : index
    %c0_1 = arith.constant 0 : index
    %1 = vector.load %arg7[%c1, %c0_1] : memref<8x128xf32, #tpu.memory_space<vmem>>, vector<1x128xf32>
    %c2 = arith.constant 2 : index
    %c0_2 = arith.constant 0 : index
    %2 = vector.load %arg7[%c2, %c0_2] : memref<8x128xf32, #tpu.memory_space<vmem>>, vector<1x128xf32>
    %c3 = arith.constant 3 : index
    %c0_3 = arith.constant 0 : index
    %3 = vector.load %arg7[%c3, %c0_3] : memref<8x128xf32, #tpu.memory_space<vmem>>, vector<1x128xf32>
    %c4 = arith.constant 4 : index
    %c0_4 = arith.constant 0 : index
    %4 = vector.load %arg7[%c4, %c0_4] : memref<8x128xf32, #tpu.memory_space<vmem>>, vector<1x128xf32>
    %c5 = arith.constant 5 : index
    %c0_5 = arith.constant 0 : index
    %5 = vector.load %arg7[%c5, %c0_5] : memref<8x128xf32, #tpu.memory_space<vmem>>, vector<1x128xf32>
    %c6 = arith.constant 6 : index
    %c0_6 = arith.constant 0 : index
    %6 = vector.load %arg7[%c6, %c0_6] : memref<8x128xf32, #tpu.memory_space<vmem>>, vector<1x128xf32>
    %c0_7 = arith.constant 0 : index
    %c0_8 = arith.constant 0 : index
    %c0_9 = arith.constant 0 : index
    %7 = vector.load %arg8[%c0_7, %c0_8, %c0_9] : memref<2x16x16xf32, #tpu.memory_space<vmem>>, vector<1x16x16xf32>
    %8 = vector.shape_cast %7 : vector<1x16x16xf32> to vector<16x16xf32>
    %c1_10 = arith.constant 1 : index
    %c0_11 = arith.constant 0 : index
    %c0_12 = arith.constant 0 : index
    %9 = vector.load %arg8[%c1_10, %c0_11, %c0_12] : memref<2x16x16xf32, #tpu.memory_space<vmem>>, vector<1x16x16xf32>
    %10 = vector.shape_cast %9 : vector<1x16x16xf32> to vector<16x16xf32>
    %c0_13 = arith.constant 0 : index
    %c0_14 = arith.constant 0 : index
    %11 = vector.load %arg1[%c0_13, %c0_14] : memref<16x256xf32, #tpu.memory_space<vmem>>, vector<16x256xf32>
    %12 = arith.truncf %11 : vector<16x256xf32> to vector<16x256xbf16>
    %c0_15 = arith.constant 0 : index
    %c0_16 = arith.constant 0 : index
    %13 = vector.load %arg3[%c0_15, %c0_16] : memref<256x512xbf16, #tpu.memory_space<vmem>>, vector<256x512xbf16>
    %cst = arith.constant dense<0.000000e+00> : vector<16x512xf32>
    %14 = tpu.matmul %12, %13, %cst {dimension_numbers = #tpu.dot_dimension_numbers<[1], [0], [0], [1], [0, 0, 1, 1], [], []>} : vector<16x256xbf16>, vector<256x512xbf16>, vector<16x512xf32> -> vector<16x512xf32>
    %15 = vector.extract_strided_slice %14 {offsets = [0, 0], sizes = [16, 128], strides = [1, 1]} : vector<16x512xf32> to vector<16x128xf32>
    %16 = vector.extract_strided_slice %14 {offsets = [0, 128], sizes = [16, 128], strides = [1, 1]} : vector<16x512xf32> to vector<16x128xf32>
    %17 = vector.extract_strided_slice %14 {offsets = [0, 256], sizes = [16, 128], strides = [1, 1]} : vector<16x512xf32> to vector<16x128xf32>
    %18 = vector.extract_strided_slice %14 {offsets = [0, 384], sizes = [16, 128], strides = [1, 1]} : vector<16x512xf32> to vector<16x128xf32>
    %c0_17 = arith.constant 0 : index
    %c0_18 = arith.constant 0 : index
    %19 = vector.load %arg2[%c0_17, %c0_18] : memref<16x16xf32, #tpu.memory_space<vmem>>, vector<16x16xf32>
    %20 = arith.truncf %19 : vector<16x16xf32> to vector<16x16xbf16>
    %c0_19 = arith.constant 0 : index
    %c0_20 = arith.constant 0 : index
    %21 = vector.load %arg5[%c0_19, %c0_20] : memref<16x128xbf16, #tpu.memory_space<vmem>>, vector<16x128xbf16>
    %cst_21 = arith.constant dense<0.000000e+00> : vector<16x128xf32>
    %22 = tpu.matmul %20, %21, %cst_21 {dimension_numbers = #tpu.dot_dimension_numbers<[1], [0], [0], [1], [0, 0, 1, 1], [], []>} : vector<16x16xbf16>, vector<16x128xbf16>, vector<16x128xf32> -> vector<16x128xf32>
    %23 = vector.broadcast %2 : vector<1x128xf32> to vector<16x128xf32>
    %24 = arith.addf %22, %23 : vector<16x128xf32>
    %cst_22 = arith.constant dense<0.000000e+00> : vector<16x128xf32>
    %25 = tpu.matmul %10, %15, %cst_22 {dimension_numbers = #tpu.dot_dimension_numbers<[1], [0], [0], [1], [0, 0, 1, 1], [], []>} : vector<16x16xf32>, vector<16x128xf32>, vector<16x128xf32> -> vector<16x128xf32>
    %cst_23 = arith.constant dense<0.000000e+00> : vector<16x128xf32>
    %26 = tpu.matmul %8, %16, %cst_23 {dimension_numbers = #tpu.dot_dimension_numbers<[1], [0], [0], [1], [0, 0, 1, 1], [], []>} : vector<16x16xf32>, vector<16x128xf32>, vector<16x128xf32> -> vector<16x128xf32>
    %27 = arith.addf %25, %26 : vector<16x128xf32>
    %28 = arith.addf %27, %17 : vector<16x128xf32>
    %29 = vector.broadcast %0 : vector<1x128xf32> to vector<16x128xf32>
    %30 = arith.addf %28, %29 : vector<16x128xf32>
    %31 = arith.addf %30, %24 : vector<16x128xf32>
    %32 = arith.truncf %31 : vector<16x128xf32> to vector<16x128xbf16>
    %c0_24 = arith.constant 0 : index
    %c0_25 = arith.constant 0 : index
    %33 = vector.load %arg4[%c0_24, %c0_25] : memref<128x384xbf16, #tpu.memory_space<vmem>>, vector<128x384xbf16>
    %cst_26 = arith.constant dense<0.000000e+00> : vector<16x384xf32>
    %34 = tpu.matmul %32, %33, %cst_26 {dimension_numbers = #tpu.dot_dimension_numbers<[1], [0], [0], [1], [0, 0, 1, 1], [], []>} : vector<16x128xbf16>, vector<128x384xbf16>, vector<16x384xf32> -> vector<16x384xf32>
    %35 = vector.extract_strided_slice %34 {offsets = [0, 0], sizes = [16, 128], strides = [1, 1]} : vector<16x384xf32> to vector<16x128xf32>
    %36 = vector.extract_strided_slice %34 {offsets = [0, 128], sizes = [16, 128], strides = [1, 1]} : vector<16x384xf32> to vector<16x128xf32>
    %37 = vector.extract_strided_slice %34 {offsets = [0, 256], sizes = [16, 128], strides = [1, 1]} : vector<16x384xf32> to vector<16x128xf32>
    %cst_27 = arith.constant dense<0.000000e+00> : vector<16x128xf32>
    %38 = tpu.matmul %10, %35, %cst_27 {dimension_numbers = #tpu.dot_dimension_numbers<[1], [0], [0], [1], [0, 0, 1, 1], [], []>} : vector<16x16xf32>, vector<16x128xf32>, vector<16x128xf32> -> vector<16x128xf32>
    %cst_28 = arith.constant dense<0.000000e+00> : vector<16x128xf32>
    %39 = tpu.matmul %8, %36, %cst_28 {dimension_numbers = #tpu.dot_dimension_numbers<[1], [0], [0], [1], [0, 0, 1, 1], [], []>} : vector<16x16xf32>, vector<16x128xf32>, vector<16x128xf32> -> vector<16x128xf32>
    %40 = arith.addf %38, %39 : vector<16x128xf32>
    %41 = arith.addf %40, %37 : vector<16x128xf32>
    %42 = vector.broadcast %1 : vector<1x128xf32> to vector<16x128xf32>
    %43 = arith.addf %41, %42 : vector<16x128xf32>
    %44 = arith.addf %43, %31 : vector<16x128xf32>
    %cst_29 = arith.constant dense<0.000000e+00> : vector<16xf32>
    %45 = vector.multi_reduction <add>, %44, %cst_29 [1] : vector<16x128xf32> to vector<16xf32>
    %46 = vector.shape_cast %45 : vector<16xf32> to vector<16x1xf32>
    %cst_30 = arith.constant 1.280000e+02 : f32
    %47 = vector.broadcast %cst_30 : f32 to vector<16x1xf32>
    %48 = arith.divf %46, %47 : vector<16x1xf32>
    %49 = vector.broadcast %48 : vector<16x1xf32> to vector<16x128xf32>
    %50 = arith.subf %44, %49 : vector<16x128xf32>
    %51 = arith.mulf %50, %50 : vector<16x128xf32>
    %cst_31 = arith.constant dense<0.000000e+00> : vector<16xf32>
    %52 = vector.multi_reduction <add>, %51, %cst_31 [1] : vector<16x128xf32> to vector<16xf32>
    %53 = vector.shape_cast %52 : vector<16xf32> to vector<16x1xf32>
    %cst_32 = arith.constant 1.280000e+02 : f32
    %54 = vector.broadcast %cst_32 : f32 to vector<16x1xf32>
    %55 = arith.divf %53, %54 : vector<16x1xf32>
    %cst_33 = arith.constant 9.99999974E-6 : f32
    %56 = vector.broadcast %cst_33 : f32 to vector<16x1xf32>
    %57 = arith.addf %55, %56 : vector<16x1xf32>
    %58 = math.rsqrt %57 : vector<16x1xf32>
    %59 = vector.broadcast %58 : vector<16x1xf32> to vector<16x128xf32>
    %60 = arith.mulf %50, %59 : vector<16x128xf32>
    %61 = vector.broadcast %5 : vector<1x128xf32> to vector<16x128xf32>
    %62 = arith.mulf %60, %61 : vector<16x128xf32>
    %63 = vector.broadcast %6 : vector<1x128xf32> to vector<16x128xf32>
    %64 = arith.addf %62, %63 : vector<16x128xf32>
    %65 = arith.truncf %64 : vector<16x128xf32> to vector<16x128xbf16>
    %c0_34 = arith.constant 0 : index
    %c0_35 = arith.constant 0 : index
    %66 = vector.load %arg6[%c0_34, %c0_35] : memref<128x128xbf16, #tpu.memory_space<vmem>>, vector<128x128xbf16>
    %cst_36 = arith.constant dense<0.000000e+00> : vector<16x128xf32>
    %67 = tpu.matmul %65, %66, %cst_36 {dimension_numbers = #tpu.dot_dimension_numbers<[1], [0], [0], [1], [0, 0, 1, 1], [], []>} : vector<16x128xbf16>, vector<128x128xbf16>, vector<16x128xf32> -> vector<16x128xf32>
    %68 = vector.broadcast %3 : vector<1x128xf32> to vector<16x128xf32>
    %69 = arith.addf %67, %68 : vector<16x128xf32>
    %70 = arith.addf %69, %64 : vector<16x128xf32>
    %cst_37 = arith.constant 0.000000e+00 : f32
    %71 = vector.broadcast %cst_37 : f32 to vector<16x128xf32>
    %72 = arith.maximumf %70, %71 : vector<16x128xf32>
    %73 = arith.addf %72, %18 : vector<16x128xf32>
    %74 = vector.broadcast %4 : vector<1x128xf32> to vector<16x128xf32>
    %75 = arith.addf %73, %74 : vector<16x128xf32>
    %c0_38 = arith.constant 0 : index
    %c0_39 = arith.constant 0 : index
    %76 = vector.load %arg9[%c0_38, %c0_39] : memref<16x128xf32, #tpu.memory_space<vmem>>, vector<16x128xf32>
    tpu.vector_store %arg9[%c0_38, %c0_39], %75 {strides = array<i32>} : memref<16x128xf32, #tpu.memory_space<vmem>>, vector<16x128xf32>,
    return
  }
  func.func @transform_0(%arg0: i32) -> (i32, i32) {
    %c0_i32 = arith.constant 0 : i32
    %c0_i32_0 = arith.constant 0 : i32
    return %arg0, %c0_i32 : i32, i32
  }
  func.func @transform_1(%arg0: i32) -> (i32, i32) {
    %c0_i32 = arith.constant 0 : i32
    %c0_i32_0 = arith.constant 0 : i32
    return %arg0, %c0_i32 : i32, i32
  }
  func.func @transform_2(%arg0: i32) -> (i32, i32) {
    %c0_i32 = arith.constant 0 : i32
    %c0_i32_0 = arith.constant 0 : i32
    %c0_i32_1 = arith.constant 0 : i32
    return %c0_i32, %c0_i32_0 : i32, i32
  }
  func.func @transform_3(%arg0: i32) -> (i32, i32) {
    %c0_i32 = arith.constant 0 : i32
    %c0_i32_0 = arith.constant 0 : i32
    %c0_i32_1 = arith.constant 0 : i32
    return %c0_i32, %c0_i32_0 : i32, i32
  }
  func.func @transform_4(%arg0: i32) -> (i32, i32) {
    %c0_i32 = arith.constant 0 : i32
    %c0_i32_0 = arith.constant 0 : i32
    %c0_i32_1 = arith.constant 0 : i32
    return %c0_i32, %c0_i32_0 : i32, i32
  }
  func.func @transform_5(%arg0: i32) -> (i32, i32) {
    %c0_i32 = arith.constant 0 : i32
    %c0_i32_0 = arith.constant 0 : i32
    %c0_i32_1 = arith.constant 0 : i32
    return %c0_i32, %c0_i32_0 : i32, i32
  }
  func.func @transform_6(%arg0: i32) -> (i32, i32) {
    %c0_i32 = arith.constant 0 : i32
    %c0_i32_0 = arith.constant 0 : i32
    %c0_i32_1 = arith.constant 0 : i32
    return %c0_i32, %c0_i32_0 : i32, i32
  }
  func.func @transform_7(%arg0: i32) -> (i32, i32, i32) {
    %c0_i32 = arith.constant 0 : i32
    %c0_i32_0 = arith.constant 0 : i32
    %c0_i32_1 = arith.constant 0 : i32
    %c0_i32_2 = arith.constant 0 : i32
    return %c0_i32, %c0_i32_0, %c0_i32_1 : i32, i32, i32
  }
  func.func @transform_8(%arg0: i32) -> (i32, i32) {
    %c0_i32 = arith.constant 0 : i32
    %c0_i32_0 = arith.constant 0 : i32
    return %arg0, %c0_i32 : i32, i32
  }
}

</mosaic_0001>

<llo_original>
// kernel: tpu_custom_call.1
$region0: #{tpu_custom_call.1}
  #allocation0 [shape = 'u32[]', space=smem, size = 0x4, offset = 0x4, fixed_abs, tag = 'smem constant byte address 0x4 - core index']
  #allocation1 [shape = 'u32[72,128]{1,0:T(1,128)}', space=vmem, size = 0x9000, scoped, tag = 'internal scratch']
  %s0 = inlined_call_operand.hbm [shape: f32[16,256], index: 0, kind: input, shape index: {}]
  %s1 = inlined_call_operand.hbm [shape: f32[16,16], index: 1, kind: input, shape index: {}]
  %s2 = inlined_call_operand.hbm [shape: bf16[256,512], index: 2, kind: input, shape index: {}]
  %s3 = inlined_call_operand.hbm [shape: bf16[128,384], index: 3, kind: input, shape index: {}]
  %s4 = inlined_call_operand.hbm [shape: bf16[16,128], index: 4, kind: input, shape index: {}]
  %s5 = inlined_call_operand.hbm [shape: bf16[128,128], index: 5, kind: input, shape index: {}]
  %s6 = inlined_call_operand.hbm [shape: f32[8,128], index: 6, kind: input, shape index: {}]
  %s7 = inlined_call_operand.hbm [shape: f32[2,16,16], index: 7, kind: input, shape index: {}]
  %s8 = inlined_call_operand.hbm [shape: f32[16,128], index: 8, kind: output, shape index: {}]
  %s9 = sld [smem:[#allocation0]]
  $region74: #{tpu_custom_call.1} parent=0
    _
  %s11 = ssub.s32 1, %s9
  %s12 = scalar_select 0, %s11, %s9
  $region1: #{tpu_custom_call.1} parent=0
    #allocation2 [shape = 'u8[16384]{0}', space=vmem, size = 0x4000, scoped, tag = 'input window, operand 0, single buffered']
    #allocation3 [shape = 's32[1]{0}', space=sflag, size = 0x4, scoped, tag = 'scoped memory for tpu_custom_call.1']
    #allocation4 [shape = 's32[1]{0}', space=sflag, size = 0x4, scoped, tag = 'scoped memory for tpu_custom_call.1']
    #allocation5 [shape = 'u8[8192]{0}', space=vmem, size = 0x2000, scoped, tag = 'input window, operand 1, single buffered']
    #allocation6 [shape = 's32[1]{0}', space=sflag, size = 0x4, scoped, tag = 'scoped memory for tpu_custom_call.1']
    #allocation7 [shape = 'u8[262144]{0}', space=vmem, size = 0x40000, scoped, tag = 'input window, operand 2, single buffered']
    #allocation8 [shape = 'u8[98304]{0}', space=vmem, size = 0x18000, scoped, tag = 'input window, operand 3, single buffered']
    #allocation9 [shape = 's32[1]{0}', space=sflag, size = 0x4, scoped, tag = 'scoped memory for tpu_custom_call.1']
    #allocation10 [shape = 'u8[4096]{0}', space=vmem, size = 0x1000, scoped, tag = 'input window, operand 4, single buffered']
    #allocation11 [shape = 'u8[32768]{0}', space=vmem, size = 0x8000, scoped, tag = 'input window, operand 5, single buffered']
    #allocation12 [shape = 's32[1]{0}', space=sflag, size = 0x4, scoped, tag = 'scoped memory for tpu_custom_call.1']
    #allocation13 [shape = 'u8[4096]{0}', space=vmem, size = 0x1000, scoped, tag = 'input window, operand 6, single buffered']
    #allocation14 [shape = 'u8[16384]{0}', space=vmem, size = 0x4000, scoped, tag = 'input window, operand 7, single buffered']
    #allocation15 [shape = 's32[1]{0}', space=sflag, size = 0x4, scoped, tag = 'scoped memory for tpu_custom_call.1']
    #allocation16 [shape = 'u8[8192]{0}', space=vmem, size = 0x2000, scoped, tag = 'output window, operand 0, single buffered']
    %13 = vsyncpa [#allocation3], 0
    %14 = vsyncpa [#allocation6], 0
    %15 = vsyncpa [#allocation9], 0
    %16 = vsyncpa [#allocation12], 0
    %17 = vsyncpa [#allocation15], 0
    %18 = vsyncpa [#allocation4], 0
    // Predicated region
    $region2: #{tpu_custom_call.1} parent=1 // pred_check
      _
    $region3: #{tpu_custom_call.1} parent=1 // pred_check_branch
      %20 = sbr.rel (0) target = $region5
    $region4: #{tpu_custom_call.1} parent=1 // pred_region
      %22 = vsyncadd [#allocation3], 0
      %s23 = sshll.u32 %s0, 4
      %s24 = int_to_ptr.hbm [resolvable:$true] %s23
      %s25 = sshll.u32 [#allocation2], 4
      %s26 = int_to_ptr.vmem [resolvable:$true] %s25
      %31 = dma.hbm_to_vmem [thread:$0]  %s24, 512, %s26, [#allocation3], 256, 256, 16
    $region5: #{tpu_custom_call.1} parent=1 // pred_fallthru
      _
    // Predicated region
    $region6: #{tpu_custom_call.1} parent=1 // pred_check
      _
    $region7: #{tpu_custom_call.1} parent=1 // pred_check_branch
      %33 = sbr.rel (0) target = $region9
    $region8: #{tpu_custom_call.1} parent=1 // pred_region
      %35 = vsyncadd [#allocation6], 0
      %s36 = sshll.u32 %s1, 4
      %s37 = int_to_ptr.hbm [resolvable:$true] %s36
      %s38 = sshll.u32 [#allocation5], 4
      %s39 = int_to_ptr.vmem [resolvable:$true] %s38
      %44 = dma.hbm_to_vmem [thread:$0]  %s37, 256, %s39, [#allocation6], 128, 128, 8
    $region9: #{tpu_custom_call.1} parent=1 // pred_fallthru
      _
    // Predicated region
    $region10: #{tpu_custom_call.1} parent=1 // pred_check
      _
    $region11: #{tpu_custom_call.1} parent=1 // pred_check_branch
      %46 = sbr.rel (0) target = $region13
    $region12: #{tpu_custom_call.1} parent=1 // pred_region
      %48 = vsyncadd [#allocation6], 0
      %s49 = sshll.u32 %s2, 4
      %s50 = int_to_ptr.hbm [resolvable:$true] %s49
      %s51 = sshll.u32 [#allocation7], 4
      %s52 = int_to_ptr.vmem [resolvable:$true] %s51
      %57 = dma.hbm_to_vmem [thread:$0]  %s50, 8192, %s52, [#allocation6], 256, 256, 16
    $region13: #{tpu_custom_call.1} parent=1 // pred_fallthru
      _
    // Predicated region
    $region14: #{tpu_custom_call.1} parent=1 // pred_check
      _
    $region15: #{tpu_custom_call.1} parent=1 // pred_check_branch
      %59 = sbr.rel (0) target = $region17
    $region16: #{tpu_custom_call.1} parent=1 // pred_region
      %61 = vsyncadd [#allocation9], 0
      %s62 = sshll.u32 %s3, 4
      %s63 = int_to_ptr.hbm [resolvable:$true] %s62
      %s64 = sshll.u32 [#allocation8], 4
      %s65 = int_to_ptr.vmem [resolvable:$true] %s64
      %70 = dma.hbm_to_vmem [thread:$0]  %s63, 3072, %s65, [#allocation9], 192, 192, 12
    $region17: #{tpu_custom_call.1} parent=1 // pred_fallthru
      _
    // Predicated region
    $region18: #{tpu_custom_call.1} parent=1 // pred_check
      _
    $region19: #{tpu_custom_call.1} parent=1 // pred_check_branch
      %72 = sbr.rel (0) target = $region21
    $region20: #{tpu_custom_call.1} parent=1 // pred_region
      %74 = vsyncadd [#allocation9], 0
      %s75 = sshll.u32 %s4, 4
      %s76 = int_to_ptr.hbm [resolvable:$true] %s75
      %s77 = sshll.u32 [#allocation10], 4
      %s78 = int_to_ptr.vmem [resolvable:$true] %s77
      %83 = dma.hbm_to_vmem [thread:$0]  %s76, 128, %s78, [#allocation9], 64, 64, 4
    $region21: #{tpu_custom_call.1} parent=1 // pred_fallthru
      _
    // Predicated region
    $region22: #{tpu_custom_call.1} parent=1 // pred_check
      _
    $region23: #{tpu_custom_call.1} parent=1 // pred_check_branch
      %85 = sbr.rel (0) target = $region25
    $region24: #{tpu_custom_call.1} parent=1 // pred_region
      %87 = vsyncadd [#allocation12], 0
      %s88 = sshll.u32 %s5, 4
      %s89 = int_to_ptr.hbm [resolvable:$true] %s88
      %s90 = sshll.u32 [#allocation11], 4
      %s91 = int_to_ptr.vmem [resolvable:$true] %s90
      %96 = dma.hbm_to_vmem [thread:$0]  %s89, 1024, %s91, [#allocation12], 64, 64, 4
    $region25: #{tpu_custom_call.1} parent=1 // pred_fallthru
      _
    // Predicated region
    $region26: #{tpu_custom_call.1} parent=1 // pred_check
      _
    $region27: #{tpu_custom_call.1} parent=1 // pred_check_branch
      %98 = sbr.rel (0) target = $region29
    $region28: #{tpu_custom_call.1} parent=1 // pred_region
      %100 = vsyncadd [#allocation12], 0
      %s102 = sshll.u32 %s6, 4
      %s103 = int_to_ptr.hbm [resolvable:$true] %s102
      %s104 = sshll.u32 [#allocation13], 4
      %s105 = int_to_ptr.vmem [resolvable:$true] %s104
      %107 = dma.hbm_to_vmem [thread:$0]  %s103, 128, %s105, [#allocation12]
    $region29: #{tpu_custom_call.1} parent=1 // pred_fallthru
      _
    // Predicated region
    $region30: #{tpu_custom_call.1} parent=1 // pred_check
      _
    $region31: #{tpu_custom_call.1} parent=1 // pred_check_branch
      %109 = sbr.rel (0) target = $region33
    $region32: #{tpu_custom_call.1} parent=1 // pred_region
      %111 = vsyncadd [#allocation15], 0
      %s112 = sshll.u32 %s7, 4
      %s113 = int_to_ptr.hbm [resolvable:$true] %s112
      %s114 = sshll.u32 [#allocation14], 4
      %s115 = int_to_ptr.vmem [resolvable:$true] %s114
      %120 = dma.hbm_to_vmem [thread:$0]  %s113, 512, %s115, [#allocation15], 128, 128, 8
    $region33: #{tpu_custom_call.1} parent=1 // pred_fallthru
      _
    // Predicated region
    $region34: #{tpu_custom_call.1} parent=1 // pred_check
      _
    $region35: #{tpu_custom_call.1} parent=1 // pred_check_branch
      %122 = sbr.rel (0) target = $region37
    $region36: #{tpu_custom_call.1} parent=1 // pred_region
      %124 = dma.done [#allocation3], 512
    $region37: #{tpu_custom_call.1} parent=1 // pred_fallthru
      _
    // Predicated region
    $region38: #{tpu_custom_call.1} parent=1 // pred_check
      _
    $region39: #{tpu_custom_call.1} parent=1 // pred_check_branch
      %126 = sbr.rel (0) target = $region41
    $region40: #{tpu_custom_call.1} parent=1 // pred_region
      %128 = dma.done [#allocation6], 256
    $region41: #{tpu_custom_call.1} parent=1 // pred_fallthru
      _
    // Predicated region
    $region42: #{tpu_custom_call.1} parent=1 // pred_check
      _
    $region43: #{tpu_custom_call.1} parent=1 // pred_check_branch
      %130 = sbr.rel (0) target = $region45
    $region44: #{tpu_custom_call.1} parent=1 // pred_region
      %132 = dma.done [#allocation6], 8192
    $region45: #{tpu_custom_call.1} parent=1 // pred_fallthru
      _
    // Predicated region
    $region46: #{tpu_custom_call.1} parent=1 // pred_check
      _
    $region47: #{tpu_custom_call.1} parent=1 // pred_check_branch
      %134 = sbr.rel (0) target = $region49
    $region48: #{tpu_custom_call.1} parent=1 // pred_region
      %136 = dma.done [#allocation9], 3072
    $region49: #{tpu_custom_call.1} parent=1 // pred_fallthru
      _
    // Predicated region
    $region50: #{tpu_custom_call.1} parent=1 // pred_check
      _
    $region51: #{tpu_custom_call.1} parent=1 // pred_check_branch
      %138 = sbr.rel (0) target = $region53
    $region52: #{tpu_custom_call.1} parent=1 // pred_region
      %140 = dma.done [#allocation9], 128
    $region53: #{tpu_custom_call.1} parent=1 // pred_fallthru
      _
    // Predicated region
    $region54: #{tpu_custom_call.1} parent=1 // pred_check
      _
    $region55: #{tpu_custom_call.1} parent=1 // pred_check_branch
      %142 = sbr.rel (0) target = $region57
    $region56: #{tpu_custom_call.1} parent=1 // pred_region
      %144 = dma.done [#allocation12], 1024
    $region57: #{tpu_custom_call.1} parent=1 // pred_fallthru
      _
    // Predicated region
    $region58: #{tpu_custom_call.1} parent=1 // pred_check
      _
    $region59: #{tpu_custom_call.1} parent=1 // pred_check_branch
      %146 = sbr.rel (0) target = $region61
    $region60: #{tpu_custom_call.1} parent=1 // pred_region
      %148 = dma.done [#allocation12], 128
    $region61: #{tpu_custom_call.1} parent=1 // pred_fallthru
      _
    // Predicated region
    $region62: #{tpu_custom_call.1} parent=1 // pred_check
      _
    $region63: #{tpu_custom_call.1} parent=1 // pred_check_branch
      %150 = sbr.rel (0) target = $region65
    $region64: #{tpu_custom_call.1} parent=1 // pred_region
      %152 = dma.done [#allocation15], 512
    $region65: #{tpu_custom_call.1} parent=1 // pred_fallthru
      _
    %v154 = vld [vmem:[#allocation13] sm:$0x1]
    %v155 = vld [vmem:[#allocation13 + $0x1] sm:$0x1]
    %v156 = vld [vmem:[#allocation13 + $0x2] sm:$0x1]
    %v157 = vld [vmem:[#allocation13 + $0x3] sm:$0x1]
    %v158 = vld [vmem:[#allocation13 + $0x4] sm:$0x1]
    %v159 = vld [vmem:[#allocation13 + $0x5] sm:$0x1]
    %v160 = vld [vmem:[#allocation13 + $0x6] sm:$0x1]
    %v161 = vld [vmem:[#allocation14] sm:$0xff]
    %v162 = vld [vmem:[#allocation14 + $0x8] sm:$0xff]
    %s163 = scalar_lea.vmem [#allocation14], 16
    %v164 = vld [vmem:[%s163] sm:$0xff]
    %v165 = vld [vmem:[%s163 + $0x8] sm:$0xff]
    %v166 = vld [vmem:[#allocation2] sm:$0xff]
    %v167 = vld [vmem:[#allocation2 + $0x8] sm:$0xff]
    %v168 = vld [vmem:[#allocation2 + $0x10] sm:$0xff]
    %v169 = vld [vmem:[#allocation2 + $0x18] sm:$0xff]
    %v170 = vpack.c.bf16 %v168, %v166
    %v171 = vpack.c.bf16 %v169, %v167
    %v172 = vld [vmem:[#allocation7] sm:$0xff]
    %v173 = vld [vmem:[#allocation7 + $0x8] sm:$0xff]
    %v174 = vld [vmem:[#allocation7 + $0x10] sm:$0xff]
    %v175 = vld [vmem:[#allocation7 + $0x18] sm:$0xff]
    %v176 = vld [vmem:[#allocation7 + $0x20] sm:$0xff]
    %v177 = vld [vmem:[#allocation7 + $0x28] sm:$0xff]
    %v178 = vld [vmem:[#allocation7 + $0x30] sm:$0xff]
    %v179 = vld [vmem:[#allocation7 + $0x38] sm:$0xff]
    %v180 = vld [vmem:[#allocation7 + $0x40] sm:$0xff]
    %v181 = vld [vmem:[#allocation7 + $0x48] sm:$0xff]
    %v182 = vld [vmem:[#allocation7 + $0x50] sm:$0xff]
    %v183 = vld [vmem:[#allocation7 + $0x58] sm:$0xff]
    %v184 = vld [vmem:[#allocation7 + $0x60] sm:$0xff]
    %v185 = vld [vmem:[#allocation7 + $0x68] sm:$0xff]
    %v186 = vld [vmem:[#allocation7 + $0x70] sm:$0xff]
    %v187 = vld [vmem:[#allocation7 + $0x78] sm:$0xff]
    %v188 = vld [vmem:[#allocation7 + $0x80] sm:$0xff]
    %v189 = vld [vmem:[#allocation7 + $0x88] sm:$0xff]
    %v190 = vld [vmem:[#allocation7 + $0x90] sm:$0xff]
    %v191 = vld [vmem:[#allocation7 + $0x98] sm:$0xff]
    %v192 = vld [vmem:[#allocation7 + $0xa0] sm:$0xff]
    %v193 = vld [vmem:[#allocation7 + $0xa8] sm:$0xff]
    %v194 = vld [vmem:[#allocation7 + $0xb0] sm:$0xff]
    %v195 = vld [vmem:[#allocation7 + $0xb8] sm:$0xff]
    %v196 = vld [vmem:[#allocation7 + $0xc0] sm:$0xff]
    %v197 = vld [vmem:[#allocation7 + $0xc8] sm:$0xff]
    %v198 = vld [vmem:[#allocation7 + $0xd0] sm:$0xff]
    %v199 = vld [vmem:[#allocation7 + $0xd8] sm:$0xff]
    %v200 = vld [vmem:[#allocation7 + $0xe0] sm:$0xff]
    %v201 = vld [vmem:[#allocation7 + $0xe8] sm:$0xff]
    %v202 = vld [vmem:[#allocation7 + $0xf0] sm:$0xff]
    %v203 = vld [vmem:[#allocation7 + $0xf8] sm:$0xff]
    %v204 = vld [vmem:[#allocation7 + $0x100] sm:$0xff]
    %v205 = vld [vmem:[#allocation7 + $0x108] sm:$0xff]
    %v206 = vld [vmem:[#allocation7 + $0x110] sm:$0xff]
    %v207 = vld [vmem:[#allocation7 + $0x118] sm:$0xff]
    %v208 = vld [vmem:[#allocation7 + $0x120] sm:$0xff]
    %v209 = vld [vmem:[#allocation7 + $0x128] sm:$0xff]
    %v210 = vld [vmem:[#allocation7 + $0x130] sm:$0xff]
    %v211 = vld [vmem:[#allocation7 + $0x138] sm:$0xff]
    %v212 = vld [vmem:[#allocation7 + $0x140] sm:$0xff]
    %v213 = vld [vmem:[#allocation7 + $0x148] sm:$0xff]
    %v214 = vld [vmem:[#allocation7 + $0x150] sm:$0xff]
    %v215 = vld [vmem:[#allocation7 + $0x158] sm:$0xff]
    %v216 = vld [vmem:[#allocation7 + $0x160] sm:$0xff]
    %v217 = vld [vmem:[#allocation7 + $0x168] sm:$0xff]
    %v218 = vld [vmem:[#allocation7 + $0x170] sm:$0xff]
    %v219 = vld [vmem:[#allocation7 + $0x178] sm:$0xff]
    %v220 = vld [vmem:[#allocation7 + $0x180] sm:$0xff]
    %v221 = vld [vmem:[#allocation7 + $0x188] sm:$0xff]
    %v222 = vld [vmem:[#allocation7 + $0x190] sm:$0xff]
    %v223 = vld [vmem:[#allocation7 + $0x198] sm:$0xff]
    %v224 = vld [vmem:[#allocation7 + $0x1a0] sm:$0xff]
    %v225 = vld [vmem:[#allocation7 + $0x1a8] sm:$0xff]
    %v226 = vld [vmem:[#allocation7 + $0x1b0] sm:$0xff]
    %v227 = vld [vmem:[#allocation7 + $0x1b8] sm:$0xff]
    %v228 = vld [vmem:[#allocation7 + $0x1c0] sm:$0xff]
    %v229 = vld [vmem:[#allocation7 + $0x1c8] sm:$0xff]
    %v230 = vld [vmem:[#allocation7 + $0x1d0] sm:$0xff]
    %v231 = vld [vmem:[#allocation7 + $0x1d8] sm:$0xff]
    %v232 = vld [vmem:[#allocation7 + $0x1e0] sm:$0xff]
    %v233 = vld [vmem:[#allocation7 + $0x1e8] sm:$0xff]
    %v234 = vld [vmem:[#allocation7 + $0x1f0] sm:$0xff]
    %v235 = vld [vmem:[#allocation7 + $0x1f8] sm:$0xff]
    %v300 = vunpack.c.l.b16 %v172
    %v301 = vunpack.c.h.b16 %v172
    %v302 = vunpack.c.l.b16 %v173
    %v303 = vunpack.c.h.b16 %v173
    %v304 = vunpack.c.l.b16 %v174
    %v305 = vunpack.c.h.b16 %v174
    %v306 = vunpack.c.l.b16 %v175
    %v307 = vunpack.c.h.b16 %v175
    %v308 = vunpack.c.l.b16 %v176
    %v309 = vunpack.c.h.b16 %v176
    %v310 = vunpack.c.l.b16 %v177
    %v311 = vunpack.c.h.b16 %v177
    %v312 = vunpack.c.l.b16 %v178
    %v313 = vunpack.c.h.b16 %v178
    %v314 = vunpack.c.l.b16 %v179
    %v315 = vunpack.c.h.b16 %v179
    %v316 = vunpack.c.l.b16 %v180
    %v317 = vunpack.c.h.b16 %v180
    %v318 = vunpack.c.l.b16 %v181
    %v319 = vunpack.c.h.b16 %v181
    %v320 = vunpack.c.l.b16 %v182
    %v321 = vunpack.c.h.b16 %v182
    %v322 = vunpack.c.l.b16 %v183
    %v323 = vunpack.c.h.b16 %v183
    %v324 = vunpack.c.l.b16 %v184
    %v325 = vunpack.c.h.b16 %v184
    %v326 = vunpack.c.l.b16 %v185
    %v327 = vunpack.c.h.b16 %v185
    %v328 = vunpack.c.l.b16 %v186
    %v329 = vunpack.c.h.b16 %v186
    %v330 = vunpack.c.l.b16 %v187
    %v331 = vunpack.c.h.b16 %v187
    %v332 = vunpack.c.l.b16 %v188
    %v333 = vunpack.c.h.b16 %v188
    %v334 = vunpack.c.l.b16 %v189
    %v335 = vunpack.c.h.b16 %v189
    %v336 = vunpack.c.l.b16 %v190
    %v337 = vunpack.c.h.b16 %v190
    %v338 = vunpack.c.l.b16 %v191
    %v339 = vunpack.c.h.b16 %v191
    %v340 = vunpack.c.l.b16 %v192
    %v341 = vunpack.c.h.b16 %v192
    %v342 = vunpack.c.l.b16 %v193
    %v343 = vunpack.c.h.b16 %v193
    %v344 = vunpack.c.l.b16 %v194
    %v345 = vunpack.c.h.b16 %v194
    %v346 = vunpack.c.l.b16 %v195
    %v347 = vunpack.c.h.b16 %v195
    %v348 = vunpack.c.l.b16 %v196
    %v349 = vunpack.c.h.b16 %v196
    %v350 = vunpack.c.l.b16 %v197
    %v351 = vunpack.c.h.b16 %v197
    %v352 = vunpack.c.l.b16 %v198
    %v353 = vunpack.c.h.b16 %v198
    %v354 = vunpack.c.l.b16 %v199
    %v355 = vunpack.c.h.b16 %v199
    %v356 = vunpack.c.l.b16 %v200
    %v357 = vunpack.c.h.b16 %v200
    %v358 = vunpack.c.l.b16 %v201
    %v359 = vunpack.c.h.b16 %v201
    %v360 = vunpack.c.l.b16 %v202
    %v361 = vunpack.c.h.b16 %v202
    %v362 = vunpack.c.l.b16 %v203
    %v363 = vunpack.c.h.b16 %v203
    %v364 = vunpack.c.l.b16 %v204
    %v365 = vunpack.c.h.b16 %v204
    %v366 = vunpack.c.l.b16 %v205
    %v367 = vunpack.c.h.b16 %v205
    %v368 = vunpack.c.l.b16 %v206
    %v369 = vunpack.c.h.b16 %v206
    %v370 = vunpack.c.l.b16 %v207
    %v371 = vunpack.c.h.b16 %v207
    %v372 = vunpack.c.l.b16 %v208
    %v373 = vunpack.c.h.b16 %v208
    %v374 = vunpack.c.l.b16 %v209
    %v375 = vunpack.c.h.b16 %v209
    %v376 = vunpack.c.l.b16 %v210
    %v377 = vunpack.c.h.b16 %v210
    %v378 = vunpack.c.l.b16 %v211
    %v379 = vunpack.c.h.b16 %v211
    %v380 = vunpack.c.l.b16 %v212
    %v381 = vunpack.c.h.b16 %v212
    %v382 = vunpack.c.l.b16 %v213
    %v383 = vunpack.c.h.b16 %v213
    %v384 = vunpack.c.l.b16 %v214
    %v385 = vunpack.c.h.b16 %v214
    %v386 = vunpack.c.l.b16 %v215
    %v387 = vunpack.c.h.b16 %v215
    %v388 = vunpack.c.l.b16 %v216
    %v389 = vunpack.c.h.b16 %v216
    %v390 = vunpack.c.l.b16 %v217
    %v391 = vunpack.c.h.b16 %v217
    %v392 = vunpack.c.l.b16 %v218
    %v393 = vunpack.c.h.b16 %v218
    %v394 = vunpack.c.l.b16 %v219
    %v395 = vunpack.c.h.b16 %v219
    %v396 = vunpack.c.l.b16 %v220
    %v397 = vunpack.c.h.b16 %v220
    %v398 = vunpack.c.l.b16 %v221
    %v399 = vunpack.c.h.b16 %v221
    %v400 = vunpack.c.l.b16 %v222
    %v401 = vunpack.c.h.b16 %v222
    %v402 = vunpack.c.l.b16 %v223
    %v403 = vunpack.c.h.b16 %v223
    %v404 = vunpack.c.l.b16 %v224
    %v405 = vunpack.c.h.b16 %v224
    %v406 = vunpack.c.l.b16 %v225
    %v407 = vunpack.c.h.b16 %v225
    %v408 = vunpack.c.l.b16 %v226
    %v409 = vunpack.c.h.b16 %v226
    %v410 = vunpack.c.l.b16 %v227
    %v411 = vunpack.c.h.b16 %v227
    %v412 = vunpack.c.l.b16 %v228
    %v413 = vunpack.c.h.b16 %v228
    %v414 = vunpack.c.l.b16 %v229
    %v415 = vunpack.c.h.b16 %v229
    %v416 = vunpack.c.l.b16 %v230
    %v417 = vunpack.c.h.b16 %v230
    %v418 = vunpack.c.l.b16 %v231
    %v419 = vunpack.c.h.b16 %v231
    %v420 = vunpack.c.l.b16 %v232
    %v421 = vunpack.c.h.b16 %v232
    %v422 = vunpack.c.l.b16 %v233
    %v423 = vunpack.c.h.b16 %v233
    %v424 = vunpack.c.l.b16 %v234
    %v425 = vunpack.c.h.b16 %v234
    %v426 = vunpack.c.l.b16 %v235
    %v427 = vunpack.c.h.b16 %v235
    %v428 = vpack.c.b16 %v304, %v300
    %v429 = vpack.c.b16 %v305, %v301
    %v430 = vpack.c.b16 %v306, %v302
    %v431 = vpack.c.b16 %v307, %v303
    %v432 = vpack.c.b16 %v312, %v308
    %v433 = vpack.c.b16 %v313, %v309
    %v434 = vpack.c.b16 %v314, %v310
    %v435 = vpack.c.b16 %v315, %v311
    %v436 = vpack.c.b16 %v320, %v316
    %v437 = vpack.c.b16 %v321, %v317
    %v438 = vpack.c.b16 %v322, %v318
    %v439 = vpack.c.b16 %v323, %v319
    %v440 = vpack.c.b16 %v328, %v324
    %v441 = vpack.c.b16 %v329, %v325
    %v442 = vpack.c.b16 %v330, %v326
    %v443 = vpack.c.b16 %v331, %v327
    %v444 = vpack.c.b16 %v336, %v332
    %v445 = vpack.c.b16 %v337, %v333
    %v446 = vpack.c.b16 %v338, %v334
    %v447 = vpack.c.b16 %v339, %v335
    %v448 = vpack.c.b16 %v344, %v340
    %v449 = vpack.c.b16 %v345, %v341
    %v450 = vpack.c.b16 %v346, %v342
    %v451 = vpack.c.b16 %v347, %v343
    %v452 = vpack.c.b16 %v352, %v348
    %v453 = vpack.c.b16 %v353, %v349
    %v454 = vpack.c.b16 %v354, %v350
    %v455 = vpack.c.b16 %v355, %v351
    %v456 = vpack.c.b16 %v360, %v356
    %v457 = vpack.c.b16 %v361, %v357
    %v458 = vpack.c.b16 %v362, %v358
    %v459 = vpack.c.b16 %v363, %v359
    %v460 = vpack.c.b16 %v368, %v364
    %v461 = vpack.c.b16 %v369, %v365
    %v462 = vpack.c.b16 %v370, %v366
    %v463 = vpack.c.b16 %v371, %v367
    %v464 = vpack.c.b16 %v376, %v372
    %v465 = vpack.c.b16 %v377, %v373
    %v466 = vpack.c.b16 %v378, %v374
    %v467 = vpack.c.b16 %v379, %v375
    %v468 = vpack.c.b16 %v384, %v380
    %v469 = vpack.c.b16 %v385, %v381
    %v470 = vpack.c.b16 %v386, %v382
    %v471 = vpack.c.b16 %v387, %v383
    %v472 = vpack.c.b16 %v392, %v388
    %v473 = vpack.c.b16 %v393, %v389
    %v474 = vpack.c.b16 %v394, %v390
    %v475 = vpack.c.b16 %v395, %v391
    %v476 = vpack.c.b16 %v400, %v396
    %v477 = vpack.c.b16 %v401, %v397
    %v478 = vpack.c.b16 %v402, %v398
    %v479 = vpack.c.b16 %v403, %v399
    %v480 = vpack.c.b16 %v408, %v404
    %v481 = vpack.c.b16 %v409, %v405
    %v482 = vpack.c.b16 %v410, %v406
    %v483 = vpack.c.b16 %v411, %v407
    %v484 = vpack.c.b16 %v416, %v412
    %v485 = vpack.c.b16 %v417, %v413
    %v486 = vpack.c.b16 %v418, %v414
    %v487 = vpack.c.b16 %v419, %v415
    %v488 = vpack.c.b16 %v424, %v420
    %v489 = vpack.c.b16 %v425, %v421
    %v490 = vpack.c.b16 %v426, %v422
    %v491 = vpack.c.b16 %v427, %v423
    %556 = vmatpush.bf16.msra.mxu0 %v456
    %557 = vmatpush.bf16.msra.mxu0 %v452
    %558 = vmatpush.bf16.msra.mxu0 %v448
    %559 = vmatpush.bf16.msra.mxu0 %v444
    %560 = vmatpush.bf16.msra.mxu0 %v440
    %561 = vmatpush.bf16.msra.mxu0 %v436
    %562 = vmatpush.bf16.msra.mxu0 %v432
    %563 = vmatpush.bf16.msra.mxu0 %v428
    %564 = vmatmul.bf16.gmra.mxu0 %v170
    %v565 = vpop.f32.mrf.mxu0
    %v566 = vadd.f32 0.0, %v565
    %v567 = vpop.f32.mrf.mxu0
    %v568 = vadd.f32 0.0, %v567
    %569 = vdwg.mxu0
    %570 = vmatpush.bf16.msra.mxu0 %v488
    %571 = vmatpush.bf16.msra.mxu0 %v484
    %572 = vmatpush.bf16.msra.mxu0 %v480
    %573 = vmatpush.bf16.msra.mxu0 %v476
    %574 = vmatpush.bf16.msra.mxu0 %v472
    %575 = vmatpush.bf16.msra.mxu0 %v468
    %576 = vmatpush.bf16.msra.mxu0 %v464
    %577 = vmatpush.bf16.msra.mxu0 %v460
    %578 = vmatmul.bf16.gmra.mxu0 %v171
    %v579 = vpop.f32.mrf.mxu0
    %v580 = vadd.f32 %v566, %v579
    %v581 = vpop.f32.mrf.mxu0
    %v582 = vadd.f32 %v568, %v581
    %583 = vdwg.mxu0
    %584 = vmatpush.bf16.msra.mxu0 %v457
    %585 = vmatpush.bf16.msra.mxu0 %v453
    %586 = vmatpush.bf16.msra.mxu0 %v449
    %587 = vmatpush.bf16.msra.mxu0 %v445
    %588 = vmatpush.bf16.msra.mxu0 %v441
    %589 = vmatpush.bf16.msra.mxu0 %v437
    %590 = vmatpush.bf16.msra.mxu0 %v433
    %591 = vmatpush.bf16.msra.mxu0 %v429
    %592 = vmatmul.bf16.gmra.mxu0 %v170
    %v593 = vpop.f32.mrf.mxu0
    %v594 = vadd.f32 0.0, %v593
    %v595 = vpop.f32.mrf.mxu0
    %v596 = vadd.f32 0.0, %v595
    %597 = vdwg.mxu0
    %598 = vmatpush.bf16.msra.mxu0 %v489
    %599 = vmatpush.bf16.msra.mxu0 %v485
    %600 = vmatpush.bf16.msra.mxu0 %v481
    %601 = vmatpush.bf16.msra.mxu0 %v477
    %602 = vmatpush.bf16.msra.mxu0 %v473
    %603 = vmatpush.bf16.msra.mxu0 %v469
    %604 = vmatpush.bf16.msra.mxu0 %v465
    %605 = vmatpush.bf16.msra.mxu0 %v461
    %606 = vmatmul.bf16.gmra.mxu0 %v171
    %v607 = vpop.f32.mrf.mxu0
    %v608 = vadd.f32 %v594, %v607
    %v609 = vpop.f32.mrf.mxu0
    %v610 = vadd.f32 %v596, %v609
    %611 = vdwg.mxu0
    %612 = vmatpush.bf16.msra.mxu0 %v458
    %613 = vmatpush.bf16.msra.mxu0 %v454
    %614 = vmatpush.bf16.msra.mxu0 %v450
    %615 = vmatpush.bf16.msra.mxu0 %v446
    %616 = vmatpush.bf16.msra.mxu0 %v442
    %617 = vmatpush.bf16.msra.mxu0 %v438
    %618 = vmatpush.bf16.msra.mxu0 %v434
    %619 = vmatpush.bf16.msra.mxu0 %v430
    %620 = vmatmul.bf16.gmra.mxu0 %v170
    %v621 = vpop.f32.mrf.mxu0
    %v622 = vadd.f32 0.0, %v621
    %v623 = vpop.f32.mrf.mxu0
    %v624 = vadd.f32 0.0, %v623
    %625 = vdwg.mxu0
    %626 = vmatpush.bf16.msra.mxu0 %v490
    %627 = vmatpush.bf16.msra.mxu0 %v486
    %628 = vmatpush.bf16.msra.mxu0 %v482
    %629 = vmatpush.bf16.msra.mxu0 %v478
    %630 = vmatpush.bf16.msra.mxu0 %v474
    %631 = vmatpush.bf16.msra.mxu0 %v470
    %632 = vmatpush.bf16.msra.mxu0 %v466
    %633 = vmatpush.bf16.msra.mxu0 %v462
    %634 = vmatmul.bf16.gmra.mxu0 %v171
    %v635 = vpop.f32.mrf.mxu0
    %v636 = vadd.f32 %v622, %v635
    %v637 = vpop.f32.mrf.mxu0
    %v638 = vadd.f32 %v624, %v637
    %639 = vdwg.mxu0
    %640 = vmatpush.bf16.msra.mxu0 %v459
    %641 = vmatpush.bf16.msra.mxu0 %v455
    %642 = vmatpush.bf16.msra.mxu0 %v451
    %643 = vmatpush.bf16.msra.mxu0 %v447
    %644 = vmatpush.bf16.msra.mxu0 %v443
    %645 = vmatpush.bf16.msra.mxu0 %v439
    %646 = vmatpush.bf16.msra.mxu0 %v435
    %647 = vmatpush.bf16.msra.mxu0 %v431
    %648 = vmatmul.bf16.gmra.mxu0 %v170
    %v649 = vpop.f32.mrf.mxu0
    %v650 = vadd.f32 0.0, %v649
    %v651 = vpop.f32.mrf.mxu0
    %v652 = vadd.f32 0.0, %v651
    %653 = vdwg.mxu0
    %654 = vmatpush.bf16.msra.mxu0 %v491
    %655 = vmatpush.bf16.msra.mxu0 %v487
    %656 = vmatpush.bf16.msra.mxu0 %v483
    %657 = vmatpush.bf16.msra.mxu0 %v479
    %658 = vmatpush.bf16.msra.mxu0 %v475
    %659 = vmatpush.bf16.msra.mxu0 %v471
    %660 = vmatpush.bf16.msra.mxu0 %v467
    %661 = vmatpush.bf16.msra.mxu0 %v463
    %662 = vmatmul.bf16.gmra.mxu0 %v171
    %v663 = vpop.f32.mrf.mxu0
    %v664 = vadd.f32 %v650, %v663
    %v665 = vpop.f32.mrf.mxu0
    %v666 = vadd.f32 %v652, %v665
    %667 = vdwg.mxu0
    %v668 = vld [vmem:[#allocation5] sm:$0xff]
    %v669 = vld [vmem:[#allocation5 + $0x8] sm:$0xff]
    %v670 = vpack.c.bf16 %v669, %v668
    %v671 = vld [vmem:[#allocation10] sm:$0xf]
    %v672 = vld [vmem:[#allocation10 + $0x4] sm:$0xf]
    %v673 = vperm.slane %v156, 0
    %v676 = vunpack.c.l.b16 %v671
    %v677 = vunpack.c.l.b16 %v672
    %v678 = vpack.c.b16 %v677, %v676
    %vm680 = vcmask 130048
    %v682 = vsel %vm680, %v670, 0
    %684 = vmatpush.bf16.msra.mxu0 0
    %685 = vmatpush.bf16.msra.mxu0 0
    %686 = vmatpush.bf16.msra.mxu0 0
    %687 = vmatpush.bf16.msra.mxu0 0
    %688 = vmatpush.bf16.msra.mxu0 0
    %689 = vmatpush.bf16.msra.mxu0 0
    %690 = vmatpush.bf16.msra.mxu0 0
    %691 = vmatpush.bf16.msra.mxu0 %v678
    %692 = vmatmul.bf16.gmra.mxu0 %v682
    %v693 = vpop.f32.mrf.mxu0
    %v694 = vadd.f32 %v673, %v693
    %v695 = vpop.f32.mrf.mxu0
    %v696 = vadd.f32 %v673, %v695
    %697 = vdwg.mxu0
    %v699 = vsel %vm680, %v161, 0
    %v702 = vsel %vm680, %v162, 0
    %704 = vmatpush.msra.mxu0 0.0
    %705 = vmatpush.msra.mxu0 0.0
    %706 = vmatpush.msra.mxu0 0.0
    %707 = vmatpush.msra.mxu0 0.0
    %708 = vmatpush.msra.mxu0 0.0
    %709 = vmatpush.msra.mxu0 0.0
    %710 = vmatpush.msra.mxu0 0.0
    %711 = vmatpush.msra.mxu0 0.0
    %712 = vmatpush.msra.mxu0 0.0
    %713 = vmatpush.msra.mxu0 0.0
    %714 = vmatpush.msra.mxu0 0.0
    %715 = vmatpush.msra.mxu0 0.0
    %716 = vmatpush.msra.mxu0 0.0
    %717 = vmatpush.msra.mxu0 0.0
    %718 = vmatpush.msra.mxu0 %v610
    %719 = vmatpush.msra.mxu0 %v608
    %720 = vmatmul.f32.gmra.mxu0 %v699
    %v721 = vpop.f32.mrf.mxu0
    %v722 = vadd.f32 0.0, %v721
    %723 = vmatmul.f32.gmra.mxu0 %v702
    %v724 = vpop.f32.mrf.mxu0
    %v725 = vadd.f32 0.0, %v724
    %726 = vdwg.mxu0
    %v728 = vsel %vm680, %v164, 0
    %v731 = vsel %vm680, %v165, 0
    %733 = vmatpush.msra.mxu0 0.0
    %734 = vmatpush.msra.mxu0 0.0
    %735 = vmatpush.msra.mxu0 0.0
    %736 = vmatpush.msra.mxu0 0.0
    %737 = vmatpush.msra.mxu0 0.0
    %738 = vmatpush.msra.mxu0 0.0
    %739 = vmatpush.msra.mxu0 0.0
    %740 = vmatpush.msra.mxu0 0.0
    %741 = vmatpush.msra.mxu0 0.0
    %742 = vmatpush.msra.mxu0 0.0
    %743 = vmatpush.msra.mxu0 0.0
    %744 = vmatpush.msra.mxu0 0.0
    %745 = vmatpush.msra.mxu0 0.0
    %746 = vmatpush.msra.mxu0 0.0
    %747 = vmatpush.msra.mxu0 %v582
    %748 = vmatpush.msra.mxu0 %v580
    %749 = vmatmul.f32.gmra.mxu0 %v728
    %v750 = vpop.f32.mrf.mxu0
    %v751 = vadd.f32 %v722, %v750
    %752 = vmatmul.f32.gmra.mxu0 %v731
    %v753 = vpop.f32.mrf.mxu0
    %v754 = vadd.f32 %v725, %v753
    %755 = vdwg.mxu0
    %v756 = vadd.f32 %v751, %v636
    %v757 = vadd.f32 %v754, %v638
    %v758 = vperm.slane %v154, 0
    %v759 = vadd.f32 %v756, %v758
    %v760 = vadd.f32 %v757, %v758
    %v761 = vadd.f32 %v759, %v694
    %v762 = vadd.f32 %v760, %v696
    %v763 = vpack.c.bf16 %v762, %v761
    %v764 = vld [vmem:[#allocation8] sm:$0xff]
    %v765 = vld [vmem:[#allocation8 + $0x8] sm:$0xf]
    %v766 = vld [vmem:[#allocation8 + $0xc] sm:$0xff]
    %v767 = vld [vmem:[#allocation8 + $0x14] sm:$0xf]
    %v768 = vld [vmem:[#allocation8 + $0x18] sm:$0xff]
    %v769 = vld [vmem:[#allocation8 + $0x20] sm:$0xf]
    %v770 = vld [vmem:[#allocation8 + $0x24] sm:$0xff]
    %v771 = vld [vmem:[#allocation8 + $0x2c] sm:$0xf]
    %v772 = vld [vmem:[#allocation8 + $0x30] sm:$0xff]
    %v773 = vld [vmem:[#allocation8 + $0x38] sm:$0xf]
    %v774 = vld [vmem:[#allocation8 + $0x3c] sm:$0xff]
    %v775 = vld [vmem:[#allocation8 + $0x44] sm:$0xf]
    %v776 = vld [vmem:[#allocation8 + $0x48] sm:$0xff]
    %v777 = vld [vmem:[#allocation8 + $0x50] sm:$0xf]
    %v778 = vld [vmem:[#allocation8 + $0x54] sm:$0xff]
    %v779 = vld [vmem:[#allocation8 + $0x5c] sm:$0xf]
    %v780 = vld [vmem:[#allocation8 + $0x60] sm:$0xff]
    %v781 = vld [vmem:[#allocation8 + $0x68] sm:$0xf]
    %v782 = vld [vmem:[#allocation8 + $0x6c] sm:$0xff]
    %v783 = vld [vmem:[#allocation8 + $0x74] sm:$0xf]
    %v784 = vld [vmem:[#allocation8 + $0x78] sm:$0xff]
    %v785 = vld [vmem:[#allocation8 + $0x80] sm:$0xf]
    %v786 = vld [vmem:[#allocation8 + $0x84] sm:$0xff]
    %v787 = vld [vmem:[#allocation8 + $0x8c] sm:$0xf]
    %v788 = vld [vmem:[#allocation8 + $0x90] sm:$0xff]
    %v789 = vld [vmem:[#allocation8 + $0x98] sm:$0xf]
    %v790 = vld [vmem:[#allocation8 + $0x9c] sm:$0xff]
    %v791 = vld [vmem:[#allocation8 + $0xa4] sm:$0xf]
    %v792 = vld [vmem:[#allocation8 + $0xa8] sm:$0xff]
    %v793 = vld [vmem:[#allocation8 + $0xb0] sm:$0xf]
    %v794 = vld [vmem:[#allocation8 + $0xb4] sm:$0xff]
    %v795 = vld [vmem:[#allocation8 + $0xbc] sm:$0xf]
    %v828 = vunpack.c.l.b16 %v764
    %v829 = vunpack.c.h.b16 %v764
    %v830 = vunpack.c.l.b16 %v765
    %v831 = vunpack.c.l.b16 %v766
    %v832 = vunpack.c.h.b16 %v766
    %v833 = vunpack.c.l.b16 %v767
    %v834 = vunpack.c.l.b16 %v768
    %v835 = vunpack.c.h.b16 %v768
    %v836 = vunpack.c.l.b16 %v769
    %v837 = vunpack.c.l.b16 %v770
    %v838 = vunpack.c.h.b16 %v770
    %v839 = vunpack.c.l.b16 %v771
    %v840 = vunpack.c.l.b16 %v772
    %v841 = vunpack.c.h.b16 %v772
    %v842 = vunpack.c.l.b16 %v773
    %v843 = vunpack.c.l.b16 %v774
    %v844 = vunpack.c.h.b16 %v774
    %v845 = vunpack.c.l.b16 %v775
    %v846 = vunpack.c.l.b16 %v776
    %v847 = vunpack.c.h.b16 %v776
    %v848 = vunpack.c.l.b16 %v777
    %v849 = vunpack.c.l.b16 %v778
    %v850 = vunpack.c.h.b16 %v778
    %v851 = vunpack.c.l.b16 %v779
    %v852 = vunpack.c.l.b16 %v780
    %v853 = vunpack.c.h.b16 %v780
    %v854 = vunpack.c.l.b16 %v781
    %v855 = vunpack.c.l.b16 %v782
    %v856 = vunpack.c.h.b16 %v782
    %v857 = vunpack.c.l.b16 %v783
    %v858 = vunpack.c.l.b16 %v784
    %v859 = vunpack.c.h.b16 %v784
    %v860 = vunpack.c.l.b16 %v785
    %v861 = vunpack.c.l.b16 %v786
    %v862 = vunpack.c.h.b16 %v786
    %v863 = vunpack.c.l.b16 %v787
    %v864 = vunpack.c.l.b16 %v788
    %v865 = vunpack.c.h.b16 %v788
    %v866 = vunpack.c.l.b16 %v789
    %v867 = vunpack.c.l.b16 %v790
    %v868 = vunpack.c.h.b16 %v790
    %v869 = vunpack.c.l.b16 %v791
    %v870 = vunpack.c.l.b16 %v792
    %v871 = vunpack.c.h.b16 %v792
    %v872 = vunpack.c.l.b16 %v793
    %v873 = vunpack.c.l.b16 %v794
    %v874 = vunpack.c.h.b16 %v794
    %v875 = vunpack.c.l.b16 %v795
    %v876 = vpack.c.b16 %v831, %v828
    %v877 = vpack.c.b16 %v832, %v829
    %v878 = vpack.c.b16 %v833, %v830
    %v879 = vpack.c.b16 %v837, %v834
    %v880 = vpack.c.b16 %v838, %v835
    %v881 = vpack.c.b16 %v839, %v836
    %v882 = vpack.c.b16 %v843, %v840
    %v883 = vpack.c.b16 %v844, %v841
    %v884 = vpack.c.b16 %v845, %v842
    %v885 = vpack.c.b16 %v849, %v846
    %v886 = vpack.c.b16 %v850, %v847
    %v887 = vpack.c.b16 %v851, %v848
    %v888 = vpack.c.b16 %v855, %v852
    %v889 = vpack.c.b16 %v856, %v853
    %v890 = vpack.c.b16 %v857, %v854
    %v891 = vpack.c.b16 %v861, %v858
    %v892 = vpack.c.b16 %v862, %v859
    %v893 = vpack.c.b16 %v863, %v860
    %v894 = vpack.c.b16 %v867, %v864
    %v895 = vpack.c.b16 %v868, %v865
    %v896 = vpack.c.b16 %v869, %v866
    %v897 = vpack.c.b16 %v873, %v870
    %v898 = vpack.c.b16 %v874, %v871
    %v899 = vpack.c.b16 %v875, %v872
    %924 = vmatpush.bf16.msra.mxu0 %v897
    %925 = vmatpush.bf16.msra.mxu0 %v894
    %926 = vmatpush.bf16.msra.mxu0 %v891
    %927 = vmatpush.bf16.msra.mxu0 %v888
    %928 = vmatpush.bf16.msra.mxu0 %v885
    %929 = vmatpush.bf16.msra.mxu0 %v882
    %930 = vmatpush.bf16.msra.mxu0 %v879
    %931 = vmatpush.bf16.msra.mxu0 %v876
    %932 = vmatmul.bf16.gmra.mxu0 %v763
    %v933 = vpop.f32.mrf.mxu0
    %v934 = vadd.f32 0.0, %v933
    %v935 = vpop.f32.mrf.mxu0
    %v936 = vadd.f32 0.0, %v935
    %937 = vdwg.mxu0
    %938 = vmatpush.bf16.msra.mxu0 %v898
    %939 = vmatpush.bf16.msra.mxu0 %v895
    %940 = vmatpush.bf16.msra.mxu0 %v892
    %941 = vmatpush.bf16.msra.mxu0 %v889
    %942 = vmatpush.bf16.msra.mxu0 %v886
    %943 = vmatpush.bf16.msra.mxu0 %v883
    %944 = vmatpush.bf16.msra.mxu0 %v880
    %945 = vmatpush.bf16.msra.mxu0 %v877
    %946 = vmatmul.bf16.gmra.mxu0 %v763
    %v947 = vpop.f32.mrf.mxu0
    %v948 = vadd.f32 0.0, %v947
    %v949 = vpop.f32.mrf.mxu0
    %v950 = vadd.f32 0.0, %v949
    %951 = vdwg.mxu0
    %952 = vmatpush.bf16.msra.mxu0 %v899
    %953 = vmatpush.bf16.msra.mxu0 %v896
    %954 = vmatpush.bf16.msra.mxu0 %v893
    %955 = vmatpush.bf16.msra.mxu0 %v890
    %956 = vmatpush.bf16.msra.mxu0 %v887
    %957 = vmatpush.bf16.msra.mxu0 %v884
    %958 = vmatpush.bf16.msra.mxu0 %v881
    %959 = vmatpush.bf16.msra.mxu0 %v878
    %960 = vmatmul.bf16.gmra.mxu0 %v763
    %v961 = vpop.f32.mrf.mxu0
    %v962 = vadd.f32 0.0, %v961
    %v963 = vpop.f32.mrf.mxu0
    %v964 = vadd.f32 0.0, %v963
    %965 = vdwg.mxu0
    %966 = vmatpush.msra.mxu0 0.0
    %967 = vmatpush.msra.mxu0 0.0
    %968 = vmatpush.msra.mxu0 0.0
    %969 = vmatpush.msra.mxu0 0.0
    %970 = vmatpush.msra.mxu0 0.0
    %971 = vmatpush.msra.mxu0 0.0
    %972 = vmatpush.msra.mxu0 0.0
    %973 = vmatpush.msra.mxu0 0.0
    %974 = vmatpush.msra.mxu0 0.0
    %975 = vmatpush.msra.mxu0 0.0
    %976 = vmatpush.msra.mxu0 0.0
    %977 = vmatpush.msra.mxu0 0.0
    %978 = vmatpush.msra.mxu0 0.0
    %979 = vmatpush.msra.mxu0 0.0
    %980 = vmatpush.msra.mxu0 %v950
    %981 = vmatpush.msra.mxu0 %v948
    %982 = vmatmul.f32.gmra.mxu0 %v699
    %v983 = vpop.f32.mrf.mxu0
    %v984 = vadd.f32 0.0, %v983
    %985 = vmatmul.f32.gmra.mxu0 %v702
    %v986 = vpop.f32.mrf.mxu0
    %v987 = vadd.f32 0.0, %v986
    %988 = vdwg.mxu0
    %989 = vmatpush.msra.mxu0 0.0
    %990 = vmatpush.msra.mxu0 0.0
    %991 = vmatpush.msra.mxu0 0.0
    %992 = vmatpush.msra.mxu0 0.0
    %993 = vmatpush.msra.mxu0 0.0
    %994 = vmatpush.msra.mxu0 0.0
    %995 = vmatpush.msra.mxu0 0.0
    %996 = vmatpush.msra.mxu0 0.0
    %997 = vmatpush.msra.mxu0 0.0
    %998 = vmatpush.msra.mxu0 0.0
    %999 = vmatpush.msra.mxu0 0.0
    %1000 = vmatpush.msra.mxu0 0.0
    %1001 = vmatpush.msra.mxu0 0.0
    %1002 = vmatpush.msra.mxu0 0.0
    %1003 = vmatpush.msra.mxu0 %v936
    %1004 = vmatpush.msra.mxu0 %v934
    %1005 = vmatmul.f32.gmra.mxu0 %v728
    %v1006 = vpop.f32.mrf.mxu0
    %v1007 = vadd.f32 %v984, %v1006
    %1008 = vmatmul.f32.gmra.mxu0 %v731
    %v1009 = vpop.f32.mrf.mxu0
    %v1010 = vadd.f32 %v987, %v1009
    %1011 = vdwg.mxu0
    %v1012 = vadd.f32 %v1007, %v962
    %v1013 = vadd.f32 %v1010, %v964
    %v1014 = vperm.slane %v155, 0
    %v1015 = vadd.f32 %v1012, %v1014
    %v1016 = vadd.f32 %v1013, %v1014
    %v1017 = vadd.f32 %v1015, %v761
    %v1018 = vadd.f32 %v1016, %v762
    %1019 = vadd.xlane.f32.xlu0 %v1017
    %v1020 = vpop.xlane.xlu0 %1019
    %1021 = vadd.xlane.f32.xlu0 %v1018
    %v1022 = vpop.xlane.xlu0 %1021
    %v1023 = vrcp.pop 128.0
    %v1024 = vmul.f32 128.0, %v1023
    %v1025 = vsub.f32 1.0, %v1024
    %v1026 = vmul.f32 %v1023, %v1025
    %v1027 = vadd.f32 %v1023, %v1026
    %vm1028 = vweird.f32 %v1023
    %v1029 = vsel %vm1028, %v1023, %v1027
    %v1030 = vmul.f32 %v1020, %v1029
    %v1031 = vmul.f32 %v1022, %v1029
    %v1032 = vsub.f32 %v1017, %v1030
    %v1033 = vsub.f32 %v1018, %v1031
    %v1034 = vmul.f32 %v1032, %v1032
    %v1035 = vmul.f32 %v1033, %v1033
    %1036 = vadd.xlane.f32.xlu0 %v1034
    %v1037 = vpop.xlane.xlu0 %1036
    %1038 = vadd.xlane.f32.xlu0 %v1035
    %v1039 = vpop.xlane.xlu0 %1038
    %v1040 = vmul.f32 %v1037, %v1029
    %v1041 = vmul.f32 %v1039, %v1029
    %v1042 = vadd.f32 %v1040, 1e-05
    %v1043 = vadd.f32 %v1041, 1e-05
    %v1044 = vrsqrt.pop %v1042
    %v1045 = vmul.f32 %v1044, %v1042
    %v1046 = vmul.f32 %v1045, %v1044
    %v1047 = vmul.f32 0.5, %v1046
    %v1048 = vsub.f32 1.5, %v1047
    %v1049 = vmul.f32 %v1044, %v1048
    %vm1050 = vweird.f32 %v1042
    %vm1051 = vweird.f32 %v1044
    %vm1052 = vmor %vm1050, %vm1051
    %v1053 = vsel %vm1052, %v1044, %v1049
    %v1054 = vrsqrt.pop %v1043
    %v1055 = vmul.f32 %v1054, %v1043
    %v1056 = vmul.f32 %v1055, %v1054
    %v1057 = vmul.f32 0.5, %v1056
    %v1058 = vsub.f32 1.5, %v1057
    %v1059 = vmul.f32 %v1054, %v1058
    %vm1060 = vweird.f32 %v1043
    %vm1061 = vweird.f32 %v1054
    %vm1062 = vmor %vm1060, %vm1061
    %v1063 = vsel %vm1062, %v1054, %v1059
    %v1064 = vmul.f32 %v1032, %v1053
    %v1065 = vmul.f32 %v1033, %v1063
    %v1066 = vperm.slane %v159, 0
    %v1067 = vmul.f32 %v1064, %v1066
    %v1068 = vmul.f32 %v1065, %v1066
    %v1069 = vperm.slane %v160, 0
    %v1070 = vadd.f32 %v1067, %v1069
    %v1071 = vadd.f32 %v1068, %v1069
    %v1072 = vpack.c.bf16 %v1071, %v1070
    %v1073 = vld [vmem:[#allocation11] sm:$0xf]
    %v1074 = vld [vmem:[#allocation11 + $0x4] sm:$0xf]
    %v1075 = vld [vmem:[#allocation11 + $0x8] sm:$0xf]
    %v1076 = vld [vmem:[#allocation11 + $0xc] sm:$0xf]
    %v1077 = vld [vmem:[#allocation11 + $0x10] sm:$0xf]
    %v1078 = vld [vmem:[#allocation11 + $0x14] sm:$0xf]
    %v1079 = vld [vmem:[#allocation11 + $0x18] sm:$0xf]
    %v1080 = vld [vmem:[#allocation11 + $0x1c] sm:$0xf]
    %v1081 = vld [vmem:[#allocation11 + $0x20] sm:$0xf]
    %v1082 = vld [vmem:[#allocation11 + $0x24] sm:$0xf]
    %v1083 = vld [vmem:[#allocation11 + $0x28] sm:$0xf]
    %v1084 = vld [vmem:[#allocation11 + $0x2c] sm:$0xf]
    %v1085 = vld [vmem:[#allocation11 + $0x30] sm:$0xf]
    %v1086 = vld [vmem:[#allocation11 + $0x34] sm:$0xf]
    %v1087 = vld [vmem:[#allocation11 + $0x38] sm:$0xf]
    %v1088 = vld [vmem:[#allocation11 + $0x3c] sm:$0xf]
    %v1089 = vperm.slane %v157, 0
    %v1106 = vunpack.c.l.b16 %v1073
    %v1107 = vunpack.c.l.b16 %v1074
    %v1108 = vunpack.c.l.b16 %v1075
    %v1109 = vunpack.c.l.b16 %v1076
    %v1110 = vunpack.c.l.b16 %v1077
    %v1111 = vunpack.c.l.b16 %v1078
    %v1112 = vunpack.c.l.b16 %v1079
    %v1113 = vunpack.c.l.b16 %v1080
    %v1114 = vunpack.c.l.b16 %v1081
    %v1115 = vunpack.c.l.b16 %v1082
    %v1116 = vunpack.c.l.b16 %v1083
    %v1117 = vunpack.c.l.b16 %v1084
    %v1118 = vunpack.c.l.b16 %v1085
    %v1119 = vunpack.c.l.b16 %v1086
    %v1120 = vunpack.c.l.b16 %v1087
    %v1121 = vunpack.c.l.b16 %v1088
    %v1122 = vpack.c.b16 %v1107, %v1106
    %v1123 = vpack.c.b16 %v1109, %v1108
    %v1124 = vpack.c.b16 %v1111, %v1110
    %v1125 = vpack.c.b16 %v1113, %v1112
    %v1126 = vpack.c.b16 %v1115, %v1114
    %v1127 = vpack.c.b16 %v1117, %v1116
    %v1128 = vpack.c.b16 %v1119, %v1118
    %v1129 = vpack.c.b16 %v1121, %v1120
    %1138 = vmatpush.bf16.msra.mxu0 %v1129
    %1139 = vmatpush.bf16.msra.mxu0 %v1128
    %1140 = vmatpush.bf16.msra.mxu0 %v1127
    %1141 = vmatpush.bf16.msra.mxu0 %v1126
    %1142 = vmatpush.bf16.msra.mxu0 %v1125
    %1143 = vmatpush.bf16.msra.mxu0 %v1124
    %1144 = vmatpush.bf16.msra.mxu0 %v1123
    %1145 = vmatpush.bf16.msra.mxu0 %v1122
    %1146 = vmatmul.bf16.gmra.mxu0 %v1072
    %v1147 = vpop.f32.mrf.mxu0
    %v1148 = vadd.f32 %v1089, %v1147
    %v1149 = vpop.f32.mrf.mxu0
    %v1150 = vadd.f32 %v1089, %v1149
    %1151 = vdwg.mxu0
    %v1152 = vadd.f32 %v1148, %v1070
    %v1153 = vadd.f32 %v1150, %v1071
    %v1154 = vmax.f32 %v1152, 0.0
    %v1155 = vmax.f32 %v1153, 0.0
    %v1156 = vadd.f32 %v1154, %v664
    %v1157 = vadd.f32 %v1155, %v666
    %v1158 = vperm.slane %v158, 0
    %v1159 = vadd.f32 %v1156, %v1158
    %v1160 = vadd.f32 %v1157, %v1158
    %1161 = vst [vmem:[#allocation16] sm:$0xff] %v1159
    %1162 = vst [vmem:[#allocation16 + $0x8] sm:$0xff] %v1160
    // Predicated region
    $region66: #{tpu_custom_call.1} parent=1 // pred_check
      _
    $region67: #{tpu_custom_call.1} parent=1 // pred_check_branch
      %1164 = sbr.rel (0) target = $region69
    $region68: #{tpu_custom_call.1} parent=1 // pred_region
      %1166 = vsyncadd [#allocation4], 0
      %s1167 = sshll.u32 [#allocation16], 4
      %s1168 = int_to_ptr.vmem [resolvable:$true] %s1167
      %s1169 = sshll.u32 %s8, 4
      %s1170 = int_to_ptr.hbm [resolvable:$true] %s1169
      %1175 = dma.vmem_to_hbm [thread:$0]  %s1168, 256, %s1170, [#allocation4], 128, 128, 8
    $region69: #{tpu_custom_call.1} parent=1 // pred_fallthru
      _
    // Predicated region
    $region70: #{tpu_custom_call.1} parent=1 // pred_check
      _
    $region71: #{tpu_custom_call.1} parent=1 // pred_check_branch
      %1177 = sbr.rel (0) target = $region73
    $region72: #{tpu_custom_call.1} parent=1 // pred_region
      %1179 = dma.done [#allocation4], 256
    $region73: #{tpu_custom_call.1} parent=1 // pred_fallthru
      _
    %1180 = vsyncpa [#allocation3], 1
    %1181 = vsyncpa [#allocation6], 1
    %1182 = vsyncpa [#allocation9], 1
    %1183 = vsyncpa [#allocation12], 1
    %1184 = vsyncpa [#allocation15], 1
    %1185 = vsyncpa [#allocation4], 1

</llo_original>
